<compile_context>
chip_gen: v5e
topology: v5e:2x2
jax: 0.10.0
libtpu: 0.0.40
codegen_flags: <defaults>
</compile_context>

<pallas_src>
import jax
import jax.numpy as jnp
from jax.experimental import pallas as pl
from jax.experimental.pallas import tpu as pltpu


_NEG = -1e30  # finite "-inf" so the running-max correction exp(m_old - m_new) never NaNs


def _mish(v):
    # x * tanh(softplus(x)), softplus written in a stable elementwise form.
    sp = jnp.maximum(v, 0.0) + jnp.log1p(jnp.exp(-jnp.abs(v)))
    return v * jnp.tanh(sp)


def _gnn_head_kernel(
    t_ref,           # SMEM (1,)       f32  softmax-aggregation temperature
    x_ref,           # VMEM (TN, F)    f32  node-feature tile (post-GAT)
    brow_ref,        # VMEM (1, TN)    i32  graph id per node (lane-major), -1 = padding
    w_fc_p1_ref,     # VMEM (F, 128)   f32  fc weight rows that act on p1
    w_fc_p2_ref,     # VMEM (F, 128)   f32  fc weight rows that act on p2
    b_fc_ref,        # VMEM (1, 128)   f32
    w_fc2_ref,       # VMEM (128, 128) f32  fc2, zero-padded 64 -> 128 output lanes
    b_fc2_ref,       # VMEM (1, 128)   f32  zero-padded
    w_a_ref,         # VMEM (128, 128) f32  A,  zero-padded (64, 3) -> (128, 128)
    b_a_ref,         # VMEM (1, 128)   f32  zero-padded
    a_out_ref,       # VMEM (Bp, 128)  f32  lane-dense padded outputs
    feat_out_ref,    # VMEM (Bp, 128)  f32
    m_sc,            # VMEM (1,  F)    f32  shared running per-feature max (stabilizer)
    s_sc, w_sc, p2_sc,  # VMEM (Bp, F) f32  running per-graph accumulators
):
    k = pl.program_id(0)
    bp = s_sc.shape[0]
    tn = x_ref.shape[0]

    @pl.when(k == 0)
    def _init():
        m_sc[...] = jnp.full(m_sc.shape, _NEG, dtype=jnp.float32)
        s_sc[...] = jnp.zeros(s_sc.shape, dtype=jnp.float32)
        w_sc[...] = jnp.zeros(w_sc.shape, dtype=jnp.float32)
        p2_sc[...] = jnp.zeros(p2_sc.shape, dtype=jnp.float32)

    x = x_ref[...]                                   # (TN, F)
    tx = x * t_ref[0]                                # temperature-scaled logits

    # One-hot segment mask from the single lane-major batch-id row.
    # Padding nodes carry graph id -1 -> all-zero columns (excluded from segment sums).
    b_row = brow_ref[...]                            # (1, TN)
    mask_gn = (b_row == jax.lax.broadcasted_iota(jnp.int32, (bp, tn), 0)
               ).astype(jnp.float32)                 # (Bp, TN)

    # ---- online softmax statistics with a shared (1, F) stabilizer ----
    m_old = m_sc[...]                                # (1, F)
    m_new = jnp.maximum(m_old, jnp.max(tx, axis=0, keepdims=True))
    corr = jnp.exp(m_old - m_new)                    # (1, F); == 1 once the max stops moving

    e = jnp.exp(tx - m_new)                          # (TN, F), broadcast stabilizer

    # Segment sums as one-hot matmuls on the MXU.
    s_tile = jnp.dot(mask_gn, e, preferred_element_type=jnp.float32)        # (Bp, F)
    w_tile = jnp.dot(mask_gn, e * x, preferred_element_type=jnp.float32)    # (Bp, F)
    p2_tile = jnp.dot(mask_gn, x, preferred_element_type=jnp.float32)       # (Bp, F)

    m_sc[...] = m_new
    s_sc[...] = corr * s_sc[...] + s_tile
    w_sc[...] = corr * w_sc[...] + w_tile
    p2_sc[...] = p2_sc[...] + p2_tile

    # ---- finalize on the last node tile: pooled readout -> fc/mish -> fc2 -> A ----
    @pl.when(k == pl.num_programs(0) - 1)
    def _finalize():
        s = s_sc[...]
        # Rows >= num_graphs (padding graphs) have s == 0 -> p1 = p2 = 0; the MLP output
        # for those rows is meaningless and is sliced away by the wrapper.
        p1 = w_sc[...] / jnp.maximum(s, 1e-30)       # s >= 1 for any non-empty graph
        p2 = p2_sc[...]
        h = _mish(
            jnp.dot(p1, w_fc_p1_ref[...], preferred_element_type=jnp.float32)
            + jnp.dot(p2, w_fc_p2_ref[...], preferred_element_type=jnp.float32)
            + b_fc_ref[...]
        )
        feat = jnp.dot(h, w_fc2_ref[...], preferred_element_type=jnp.float32) + b_fc2_ref[...]
        a = jnp.dot(_mish(feat), w_a_ref[...], preferred_element_type=jnp.float32) + b_a_ref[...]
        feat_out_ref[...] = feat
        a_out_ref[...] = a


def _round_up(v, m):
    return (v + m - 1) // m * m


def gnn_encoder_head(x, batch, num_graphs, t,
                     w_fc, b_fc, w_fc2, b_fc2, w_a, b_a,
                     *, tile_n=2048):
    """Pooling (SoftmaxAggregation + global_add_pool) + MLP head of GNNEncoder.

    x     : (N, 128) f32 post-GAT node features
    batch : (N,) int     graph id per node, values in [0, num_graphs)
    t     : scalar       SoftmaxAggregation temperature (learn=True, init 1.0)
    w_fc  : (128, 256), b_fc (128,)   -- torch Linear layout (out, in)
    w_fc2 : (64, 128),  b_fc2 (64,)
    w_a   : (3, 64),    b_a (3,)
    Returns (A, features) with shapes ((num_graphs, 3), (num_graphs, 64)).
    """
    n, f = x.shape
    assert f == 128, "expected GAT out_channels == 128"
    assert tile_n % 128 == 0, "tile_n must be a multiple of 128 (lane width)"

    h2, oa = 64, 3
    bp = max(8, _round_up(num_graphs, 8))            # sublane-aligned graph count
    n_pad = _round_up(n, tile_n)

    x_p = jnp.pad(x.astype(jnp.float32), ((0, n_pad - n), (0, 0)))
    batch_p = jnp.pad(batch.astype(jnp.int32), (0, n_pad - n), constant_values=-1)
    batch_row = batch_p.reshape(1, n_pad)            # single lane-major id stream

    # Pre-transpose / zero-pad weights so every matmul operand and output is 128-lane dense.
    w_fc_t = w_fc.T.astype(jnp.float32)              # (256, 128)
    w_fc_p1 = w_fc_t[:f]                             # (128, 128) acts on p1
    w_fc_p2 = w_fc_t[f:]                             # (128, 128) acts on p2
    b_fc_r = b_fc.astype(jnp.float32).reshape(1, 128)

    w_fc2_p = jnp.zeros((128, 128), jnp.float32).at[:, :h2].set(w_fc2.T.astype(jnp.float32))
    b_fc2_p = jnp.zeros((1, 128), jnp.float32).at[0, :h2].set(b_fc2.astype(jnp.float32))
    w_a_p = jnp.zeros((128, 128), jnp.float32).at[:h2, :oa].set(w_a.T.astype(jnp.float32))
    b_a_p = jnp.zeros((1, 128), jnp.float32).at[0, :oa].set(b_a.astype(jnp.float32))

    t_arr = jnp.asarray(t, jnp.float32).reshape(1)

    grid = (n_pad // tile_n,)
    resident = lambda kk: (0, 0)  # weights / outputs stay VMEM-resident across node tiles

    a_pad, feat_pad = pl.pallas_call(
        _gnn_head_kernel,
        out_shape=(
            jax.ShapeDtypeStruct((bp, 128), jnp.float32),   # A (lane-padded)
            jax.ShapeDtypeStruct((bp, 128), jnp.float32),   # features (lane-padded)
        ),
        grid=grid,
        in_specs=[
            pl.BlockSpec(memory_space=pltpu.MemorySpace.SMEM),    # t (scalar)
            pl.BlockSpec((tile_n, f), lambda kk: (kk, 0)),        # x tile
            pl.BlockSpec((1, tile_n), lambda kk: (0, kk)),        # batch ids (lane-major)
            pl.BlockSpec((f, 128), resident),                     # w_fc | p1 half
            pl.BlockSpec((f, 128), resident),                     # w_fc | p2 half
            pl.BlockSpec((1, 128), resident),                     # b_fc
            pl.BlockSpec((128, 128), resident),                   # w_fc2 (padded)
            pl.BlockSpec((1, 128), resident),                     # b_fc2 (padded)
            pl.BlockSpec((128, 128), resident),                   # w_A (padded)
            pl.BlockSpec((1, 128), resident),                     # b_A (padded)
        ],
        out_specs=(
            pl.BlockSpec((bp, 128), resident),
            pl.BlockSpec((bp, 128), resident),
        ),
        scratch_shapes=[
            pltpu.VMEM((1, f), jnp.float32),                      # shared running max
            pltpu.VMEM((bp, f), jnp.float32),                     # exp-sum
            pltpu.VMEM((bp, f), jnp.float32),                     # weighted sum (p1 numerator)
            pltpu.VMEM((bp, f), jnp.float32),                     # add-pool (p2)
        ],
        compiler_params=pltpu.CompilerParams(
            dimension_semantics=("arbitrary",),     # node axis is a reduction
            # Headroom over v5e's 16 MiB default scoped VMEM so tile_n up to ~8192
            # (x double-buffer + resident weights stays well under 32 MiB everywhere).
            vmem_limit_bytes=32 * 1024 * 1024,
        ),
    )(t_arr, x_p, batch_row,
      w_fc_p1, w_fc_p2, b_fc_r, w_fc2_p, b_fc2_p, w_a_p, b_a_p)

    return a_pad[:num_graphs, :oa], feat_pad[:num_graphs, :h2]


def _reference(x, batch, num_graphs, t, w_fc, b_fc, w_fc2, b_fc2, w_a, b_a):
    tx = t * x
    seg_max = jax.ops.segment_max(tx, batch, num_segments=num_graphs)
    e = jnp.exp(tx - seg_max[batch])
    denom = jax.ops.segment_sum(e, batch, num_segments=num_graphs)
    alpha = e / denom[batch]
    p1 = jax.ops.segment_sum(alpha * x, batch, num_segments=num_graphs)
    p2 = jax.ops.segment_sum(x, batch, num_segments=num_graphs)
    pooled = jnp.concatenate([p1, p2], axis=1)
    h = _mish(pooled @ w_fc.T + b_fc)
    feat = h @ w_fc2.T + b_fc2
    a = _mish(feat) @ w_a.T + b_a
    return a, feat


if __name__ == "__main__":
    key = jax.random.PRNGKey(0)
    num_graphs = 4          # graphs in the mini-batch
    n_nodes = 200           # total nodes -> padded to 2 node tiles of 128 inside
    f = 128                 # GAT out_channels
    h1, h2, oa = 128, 64, 3

    ks = jax.random.split(key, 8)
    x = jax.random.normal(ks[0], (n_nodes, f), dtype=jnp.float32)  # stand-in for GAT output
    batch = jnp.concatenate([
        jnp.arange(num_graphs, dtype=jnp.int32),                   # every graph non-empty
        jax.random.randint(ks[1], (n_nodes - num_graphs,), 0, num_graphs, jnp.int32),
    ])
    t = jnp.float32(1.0)    # SoftmaxAggregation(learn=True) temperature init

    def _uinit(k, shape, fan_in):
        lim = 1.0 / jnp.sqrt(jnp.float32(fan_in))
        return jax.random.uniform(k, shape, jnp.float32, -lim, lim)

    w_fc = _uinit(ks[2], (h1, 2 * f), 2 * f)
    b_fc = _uinit(ks[3], (h1,), 2 * f)
    w_fc2 = _uinit(ks[4], (h2, h1), h1)
    b_fc2 = _uinit(ks[5], (h2,), h1)
    w_a = _uinit(ks[6], (oa, h2), h2)
    b_a = _uinit(ks[7], (oa,), h2)

    # tile_n=128 so this small demo exercises the multi-tile accumulation path;
    # the production default (2048) amortizes the ~0.35us per-grid-step overhead.
    a_out, feats = gnn_encoder_head(x, batch, num_graphs, t,
                                    w_fc, b_fc, w_fc2, b_fc2, w_a, b_a,
                                    tile_n=128)
    a_out = jax.block_until_ready(a_out)
    feats = jax.block_until_ready(feats)

    a_ref, feat_ref = _reference(x, batch, num_graphs, t,
                                 w_fc, b_fc, w_fc2, b_fc2, w_a, b_a)

    assert a_out.shape == (num_graphs, oa), a_out.shape
    assert feats.shape == (num_graphs, h2), feats.shape
    assert jnp.allclose(feats, feat_ref, atol=2e-2, rtol=2e-2), \
        float(jnp.max(jnp.abs(feats - feat_ref)))
    assert jnp.allclose(a_out, a_ref, atol=2e-2, rtol=2e-2), \
        float(jnp.max(jnp.abs(a_out - a_ref)))

    print("KERNEL_OK")
</pallas_src>

<mosaic_0001>
module attributes {stable_mosaic.version = 11 : i64} {
  func.func @_gnn_head_kernel(%arg0: i32, %arg1: memref<1xf32, #tpu.memory_space<smem>>, %arg2: memref<128x128xf32, #tpu.memory_space<vmem>>, %arg3: memref<1x128xi32, #tpu.memory_space<vmem>>, %arg4: memref<128x128xf32, #tpu.memory_space<vmem>>, %arg5: memref<128x128xf32, #tpu.memory_space<vmem>>, %arg6: memref<1x128xf32, #tpu.memory_space<vmem>>, %arg7: memref<128x128xf32, #tpu.memory_space<vmem>>, %arg8: memref<1x128xf32, #tpu.memory_space<vmem>>, %arg9: memref<128x128xf32, #tpu.memory_space<vmem>>, %arg10: memref<1x128xf32, #tpu.memory_space<vmem>>, %arg11: memref<8x128xf32, #tpu.memory_space<vmem>>, %arg12: memref<8x128xf32, #tpu.memory_space<vmem>>, %arg13: memref<1x128xf32, #tpu.memory_space<vmem>>, %arg14: memref<8x128xf32, #tpu.memory_space<vmem>>, %arg15: memref<8x128xf32, #tpu.memory_space<vmem>>, %arg16: memref<8x128xf32, #tpu.memory_space<vmem>>) attributes {dimension_semantics = [#tpu.dimension_semantics<arbitrary>], iteration_bounds = array<i64: 2>, scalar_prefetch = 0 : i64, scratch_operands = 4 : i64, tpu.core_type = #tpu.core_type<tc>, window_params = [{transform_indices = @transform_0, window_bounds = array<i64: 1>}, {transform_indices = @transform_1, window_bounds = array<i64: 128, 128>}, {transform_indices = @transform_2, window_bounds = array<i64: 1, 128>}, {pipeline_mode = #tpu.pipeline_mode<synchronous>, transform_indices = @transform_3, window_bounds = array<i64: 128, 128>}, {pipeline_mode = #tpu.pipeline_mode<synchronous>, transform_indices = @transform_4, window_bounds = array<i64: 128, 128>}, {pipeline_mode = #tpu.pipeline_mode<synchronous>, transform_indices = @transform_5, window_bounds = array<i64: 1, 128>}, {pipeline_mode = #tpu.pipeline_mode<synchronous>, transform_indices = @transform_6, window_bounds = array<i64: 128, 128>}, {pipeline_mode = #tpu.pipeline_mode<synchronous>, transform_indices = @transform_7, window_bounds = array<i64: 1, 128>}, {pipeline_mode = #tpu.pipeline_mode<synchronous>, transform_indices = @transform_8, window_bounds = array<i64: 128, 128>}, {pipeline_mode = #tpu.pipeline_mode<synchronous>, transform_indices = @transform_9, window_bounds = array<i64: 1, 128>}, {pipeline_mode = #tpu.pipeline_mode<synchronous>, transform_indices = @transform_10, window_bounds = array<i64: 8, 128>}, {pipeline_mode = #tpu.pipeline_mode<synchronous>, transform_indices = @transform_11, window_bounds = array<i64: 8, 128>}]} {
    %c0_i32 = arith.constant 0 : i32
    %0 = arith.cmpi eq, %arg0, %c0_i32 : i32
    %1 = arith.extui %0 : i1 to i32
    %c0_i32_0 = arith.constant 0 : i32
    %2 = arith.cmpi ne, %1, %c0_i32_0 : i32
    scf.if %2 {
      %cst_25 = arith.constant -1.000000e+30 : f32
      %43 = vector.broadcast %cst_25 : f32 to vector<1x128xf32>
      %c0_26 = arith.constant 0 : index
      %c0_27 = arith.constant 0 : index
      %44 = vector.load %arg13[%c0_26, %c0_27] : memref<1x128xf32, #tpu.memory_space<vmem>>, vector<1x128xf32>
      tpu.vector_store %arg13[%c0_26, %c0_27], %43 {strides = array<i32>} : memref<1x128xf32, #tpu.memory_space<vmem>>, vector<1x128xf32>,
      %cst_28 = arith.constant 0.000000e+00 : f32
      %45 = vector.broadcast %cst_28 : f32 to vector<8x128xf32>
      %c0_29 = arith.constant 0 : index
      %c0_30 = arith.constant 0 : index
      %46 = vector.load %arg14[%c0_29, %c0_30] : memref<8x128xf32, #tpu.memory_space<vmem>>, vector<8x128xf32>
      tpu.vector_store %arg14[%c0_29, %c0_30], %45 {strides = array<i32>} : memref<8x128xf32, #tpu.memory_space<vmem>>, vector<8x128xf32>,
      %cst_31 = arith.constant 0.000000e+00 : f32
      %47 = vector.broadcast %cst_31 : f32 to vector<8x128xf32>
      %c0_32 = arith.constant 0 : index
      %c0_33 = arith.constant 0 : index
      %48 = vector.load %arg15[%c0_32, %c0_33] : memref<8x128xf32, #tpu.memory_space<vmem>>, vector<8x128xf32>
      tpu.vector_store %arg15[%c0_32, %c0_33], %47 {strides = array<i32>} : memref<8x128xf32, #tpu.memory_space<vmem>>, vector<8x128xf32>,
      %cst_34 = arith.constant 0.000000e+00 : f32
      %49 = vector.broadcast %cst_34 : f32 to vector<8x128xf32>
      %c0_35 = arith.constant 0 : index
      %c0_36 = arith.constant 0 : index
      %50 = vector.load %arg16[%c0_35, %c0_36] : memref<8x128xf32, #tpu.memory_space<vmem>>, vector<8x128xf32>
      tpu.vector_store %arg16[%c0_35, %c0_36], %49 {strides = array<i32>} : memref<8x128xf32, #tpu.memory_space<vmem>>, vector<8x128xf32>,
    } else {
    }
    %c0 = arith.constant 0 : index
    %c0_1 = arith.constant 0 : index
    %3 = vector.load %arg2[%c0, %c0_1] : memref<128x128xf32, #tpu.memory_space<vmem>>, vector<128x128xf32>
    %c0_2 = arith.constant 0 : index
    %4 = memref.load %arg1[%c0_2] : memref<1xf32, #tpu.memory_space<smem>>
    %5 = vector.broadcast %4 : f32 to vector<128x128xf32>
    %6 = arith.mulf %3, %5 : vector<128x128xf32>
    %c0_3 = arith.constant 0 : index
    %c0_4 = arith.constant 0 : index
    %7 = vector.load %arg3[%c0_3, %c0_4] : memref<1x128xi32, #tpu.memory_space<vmem>>, vector<1x128xi32>
    %8 = tpu.iota {dimensions = array<i32: 0>} : vector<8x128xi32>
    %9 = vector.broadcast %7 : vector<1x128xi32> to vector<8x128xi32>
    %10 = arith.cmpi eq, %9, %8 : vector<8x128xi32>
    %11 = arith.extui %10 : vector<8x128xi1> to vector<8x128xi32>
    %12 = arith.sitofp %11 : vector<8x128xi32> to vector<8x128xf32>
    %c0_5 = arith.constant 0 : index
    %c0_6 = arith.constant 0 : index
    %13 = vector.load %arg13[%c0_5, %c0_6] : memref<1x128xf32, #tpu.memory_space<vmem>>, vector<1x128xf32>
    %cst = arith.constant dense<0xFF800000> : vector<128xf32>
    %14 = vector.multi_reduction <maximumf>, %6, %cst [0] : vector<128x128xf32> to vector<128xf32>
    %15 = vector.shape_cast %14 : vector<128xf32> to vector<1x128xf32>
    %16 = arith.maximumf %13, %15 : vector<1x128xf32>
    %17 = arith.subf %13, %16 : vector<1x128xf32>
    %18 = math.exp %17 : vector<1x128xf32>
    %19 = vector.broadcast %16 : vector<1x128xf32> to vector<128x128xf32>
    %20 = arith.subf %6, %19 : vector<128x128xf32>
    %21 = math.exp %20 : vector<128x128xf32>
    %cst_7 = arith.constant dense<0.000000e+00> : vector<8x128xf32>
    %22 = tpu.matmul %12, %21, %cst_7 {dimension_numbers = #tpu.dot_dimension_numbers<[1], [0], [0], [1], [0, 0, 1, 1], [], []>} : vector<8x128xf32>, vector<128x128xf32>, vector<8x128xf32> -> vector<8x128xf32>
    %23 = arith.mulf %21, %3 : vector<128x128xf32>
    %cst_8 = arith.constant dense<0.000000e+00> : vector<8x128xf32>
    %24 = tpu.matmul %12, %23, %cst_8 {dimension_numbers = #tpu.dot_dimension_numbers<[1], [0], [0], [1], [0, 0, 1, 1], [], []>} : vector<8x128xf32>, vector<128x128xf32>, vector<8x128xf32> -> vector<8x128xf32>
    %cst_9 = arith.constant dense<0.000000e+00> : vector<8x128xf32>
    %25 = tpu.matmul %12, %3, %cst_9 {dimension_numbers = #tpu.dot_dimension_numbers<[1], [0], [0], [1], [0, 0, 1, 1], [], []>} : vector<8x128xf32>, vector<128x128xf32>, vector<8x128xf32> -> vector<8x128xf32>
    %c0_10 = arith.constant 0 : index
    %c0_11 = arith.constant 0 : index
    %26 = vector.load %arg13[%c0_10, %c0_11] : memref<1x128xf32, #tpu.memory_space<vmem>>, vector<1x128xf32>
    tpu.vector_store %arg13[%c0_10, %c0_11], %16 {strides = array<i32>} : memref<1x128xf32, #tpu.memory_space<vmem>>, vector<1x128xf32>,
    %c0_12 = arith.constant 0 : index
    %c0_13 = arith.constant 0 : index
    %27 = vector.load %arg14[%c0_12, %c0_13] : memref<8x128xf32, #tpu.memory_space<vmem>>, vector<8x128xf32>
    %28 = vector.broadcast %18 : vector<1x128xf32> to vector<8x128xf32>
    %29 = arith.mulf %28, %27 : vector<8x128xf32>
    %30 = arith.addf %29, %22 : vector<8x128xf32>
    %c0_14 = arith.constant 0 : index
    %c0_15 = arith.constant 0 : index
    %31 = vector.load %arg14[%c0_14, %c0_15] : memref<8x128xf32, #tpu.memory_space<vmem>>, vector<8x128xf32>
    tpu.vector_store %arg14[%c0_14, %c0_15], %30 {strides = array<i32>} : memref<8x128xf32, #tpu.memory_space<vmem>>, vector<8x128xf32>,
    %c0_16 = arith.constant 0 : index
    %c0_17 = arith.constant 0 : index
    %32 = vector.load %arg15[%c0_16, %c0_17] : memref<8x128xf32, #tpu.memory_space<vmem>>, vector<8x128xf32>
    %33 = vector.broadcast %18 : vector<1x128xf32> to vector<8x128xf32>
    %34 = arith.mulf %33, %32 : vector<8x128xf32>
    %35 = arith.addf %34, %24 : vector<8x128xf32>
    %c0_18 = arith.constant 0 : index
    %c0_19 = arith.constant 0 : index
    %36 = vector.load %arg15[%c0_18, %c0_19] : memref<8x128xf32, #tpu.memory_space<vmem>>, vector<8x128xf32>
    tpu.vector_store %arg15[%c0_18, %c0_19], %35 {strides = array<i32>} : memref<8x128xf32, #tpu.memory_space<vmem>>, vector<8x128xf32>,
    %c0_20 = arith.constant 0 : index
    %c0_21 = arith.constant 0 : index
    %37 = vector.load %arg16[%c0_20, %c0_21] : memref<8x128xf32, #tpu.memory_space<vmem>>, vector<8x128xf32>
    %38 = arith.addf %37, %25 : vector<8x128xf32>
    %c0_22 = arith.constant 0 : index
    %c0_23 = arith.constant 0 : index
    %39 = vector.load %arg16[%c0_22, %c0_23] : memref<8x128xf32, #tpu.memory_space<vmem>>, vector<8x128xf32>
    tpu.vector_store %arg16[%c0_22, %c0_23], %38 {strides = array<i32>} : memref<8x128xf32, #tpu.memory_space<vmem>>, vector<8x128xf32>,
    %c1_i32 = arith.constant 1 : i32
    %40 = arith.cmpi eq, %arg0, %c1_i32 : i32
    %41 = arith.extui %40 : i1 to i32
    %c0_i32_24 = arith.constant 0 : i32
    %42 = arith.cmpi ne, %41, %c0_i32_24 : i32
    scf.if %42 {
      %c0_25 = arith.constant 0 : index
      %c0_26 = arith.constant 0 : index
      %43 = vector.load %arg14[%c0_25, %c0_26] : memref<8x128xf32, #tpu.memory_space<vmem>>, vector<8x128xf32>
      %c0_27 = arith.constant 0 : index
      %c0_28 = arith.constant 0 : index
      %44 = vector.load %arg15[%c0_27, %c0_28] : memref<8x128xf32, #tpu.memory_space<vmem>>, vector<8x128xf32>
      %cst_29 = arith.constant 1.000000e-30 : f32
      %45 = vector.broadcast %cst_29 : f32 to vector<8x128xf32>
      %46 = arith.maximumf %43, %45 : vector<8x128xf32>
      %47 = arith.divf %44, %46 : vector<8x128xf32>
      %c0_30 = arith.constant 0 : index
      %c0_31 = arith.constant 0 : index
      %48 = vector.load %arg16[%c0_30, %c0_31] : memref<8x128xf32, #tpu.memory_space<vmem>>, vector<8x128xf32>
      %c0_32 = arith.constant 0 : index
      %c0_33 = arith.constant 0 : index
      %49 = vector.load %arg4[%c0_32, %c0_33] : memref<128x128xf32, #tpu.memory_space<vmem>>, vector<128x128xf32>
      %cst_34 = arith.constant dense<0.000000e+00> : vector<8x128xf32>
      %50 = tpu.matmul %47, %49, %cst_34 {dimension_numbers = #tpu.dot_dimension_numbers<[1], [0], [0], [1], [0, 0, 1, 1], [], []>} : vector<8x128xf32>, vector<128x128xf32>, vector<8x128xf32> -> vector<8x128xf32>
      %c0_35 = arith.constant 0 : index
      %c0_36 = arith.constant 0 : index
      %51 = vector.load %arg5[%c0_35, %c0_36] : memref<128x128xf32, #tpu.memory_space<vmem>>, vector<128x128xf32>
      %cst_37 = arith.constant dense<0.000000e+00> : vector<8x128xf32>
      %52 = tpu.matmul %48, %51, %cst_37 {dimension_numbers = #tpu.dot_dimension_numbers<[1], [0], [0], [1], [0, 0, 1, 1], [], []>} : vector<8x128xf32>, vector<128x128xf32>, vector<8x128xf32> -> vector<8x128xf32>
      %53 = arith.addf %50, %52 : vector<8x128xf32>
      %c0_38 = arith.constant 0 : index
      %c0_39 = arith.constant 0 : index
      %54 = vector.load %arg6[%c0_38, %c0_39] : memref<1x128xf32, #tpu.memory_space<vmem>>, vector<1x128xf32>
      %55 = vector.broadcast %54 : vector<1x128xf32> to vector<8x128xf32>
      %56 = arith.addf %53, %55 : vector<8x128xf32>
      %cst_40 = arith.constant 0.000000e+00 : f32
      %57 = vector.broadcast %cst_40 : f32 to vector<8x128xf32>
      %58 = arith.maximumf %56, %57 : vector<8x128xf32>
      %59 = math.absf %56 : vector<8x128xf32>
      %cst_41 = arith.constant 0.000000e+00 : f32
      %60 = vector.broadcast %cst_41 : f32 to vector<8x128xf32>
      %61 = arith.subf %60, %59 : vector<8x128xf32>
      %62 = math.exp %61 : vector<8x128xf32>
      %63 = math.log1p %62 : vector<8x128xf32>
      %64 = arith.addf %58, %63 : vector<8x128xf32>
      %65 = math.tanh %64 : vector<8x128xf32>
      %66 = arith.mulf %56, %65 : vector<8x128xf32>
      %c0_42 = arith.constant 0 : index
      %c0_43 = arith.constant 0 : index
      %67 = vector.load %arg7[%c0_42, %c0_43] : memref<128x128xf32, #tpu.memory_space<vmem>>, vector<128x128xf32>
      %cst_44 = arith.constant dense<0.000000e+00> : vector<8x128xf32>
      %68 = tpu.matmul %66, %67, %cst_44 {dimension_numbers = #tpu.dot_dimension_numbers<[1], [0], [0], [1], [0, 0, 1, 1], [], []>} : vector<8x128xf32>, vector<128x128xf32>, vector<8x128xf32> -> vector<8x128xf32>
      %c0_45 = arith.constant 0 : index
      %c0_46 = arith.constant 0 : index
      %69 = vector.load %arg8[%c0_45, %c0_46] : memref<1x128xf32, #tpu.memory_space<vmem>>, vector<1x128xf32>
      %70 = vector.broadcast %69 : vector<1x128xf32> to vector<8x128xf32>
      %71 = arith.addf %68, %70 : vector<8x128xf32>
      %cst_47 = arith.constant 0.000000e+00 : f32
      %72 = vector.broadcast %cst_47 : f32 to vector<8x128xf32>
      %73 = arith.maximumf %71, %72 : vector<8x128xf32>
      %74 = math.absf %71 : vector<8x128xf32>
      %cst_48 = arith.constant 0.000000e+00 : f32
      %75 = vector.broadcast %cst_48 : f32 to vector<8x128xf32>
      %76 = arith.subf %75, %74 : vector<8x128xf32>
      %77 = math.exp %76 : vector<8x128xf32>
      %78 = math.log1p %77 : vector<8x128xf32>
      %79 = arith.addf %73, %78 : vector<8x128xf32>
      %80 = math.tanh %79 : vector<8x128xf32>
      %81 = arith.mulf %71, %80 : vector<8x128xf32>
      %c0_49 = arith.constant 0 : index
      %c0_50 = arith.constant 0 : index
      %82 = vector.load %arg9[%c0_49, %c0_50] : memref<128x128xf32, #tpu.memory_space<vmem>>, vector<128x128xf32>
      %cst_51 = arith.constant dense<0.000000e+00> : vector<8x128xf32>
      %83 = tpu.matmul %81, %82, %cst_51 {dimension_numbers = #tpu.dot_dimension_numbers<[1], [0], [0], [1], [0, 0, 1, 1], [], []>} : vector<8x128xf32>, vector<128x128xf32>, vector<8x128xf32> -> vector<8x128xf32>
      %c0_52 = arith.constant 0 : index
      %c0_53 = arith.constant 0 : index
      %84 = vector.load %arg10[%c0_52, %c0_53] : memref<1x128xf32, #tpu.memory_space<vmem>>, vector<1x128xf32>
      %85 = vector.broadcast %84 : vector<1x128xf32> to vector<8x128xf32>
      %86 = arith.addf %83, %85 : vector<8x128xf32>
      %c0_54 = arith.constant 0 : index
      %c0_55 = arith.constant 0 : index
      %87 = vector.load %arg12[%c0_54, %c0_55] : memref<8x128xf32, #tpu.memory_space<vmem>>, vector<8x128xf32>
      tpu.vector_store %arg12[%c0_54, %c0_55], %71 {strides = array<i32>} : memref<8x128xf32, #tpu.memory_space<vmem>>, vector<8x128xf32>,
      %c0_56 = arith.constant 0 : index
      %c0_57 = arith.constant 0 : index
      %88 = vector.load %arg11[%c0_56, %c0_57] : memref<8x128xf32, #tpu.memory_space<vmem>>, vector<8x128xf32>
      tpu.vector_store %arg11[%c0_56, %c0_57], %86 {strides = array<i32>} : memref<8x128xf32, #tpu.memory_space<vmem>>, vector<8x128xf32>,
    } else {
    }
    return
  }
  func.func @transform_0(%arg0: i32) -> i32 {
    %c0_i32 = arith.constant 0 : i32
    %c0_i32_0 = arith.constant 0 : i32
    return %c0_i32 : i32
  }
  func.func @transform_1(%arg0: i32) -> (i32, i32) {
    %c0_i32 = arith.constant 0 : i32
    %c0_i32_0 = arith.constant 0 : i32
    return %arg0, %c0_i32 : i32, i32
  }
  func.func @transform_2(%arg0: i32) -> (i32, i32) {
    %c0_i32 = arith.constant 0 : i32
    %c0_i32_0 = arith.constant 0 : i32
    return %c0_i32, %arg0 : i32, i32
  }
  func.func @transform_3(%arg0: i32) -> (i32, i32) {
    %c0_i32 = arith.constant 0 : i32
    %c0_i32_0 = arith.constant 0 : i32
    %c0_i32_1 = arith.constant 0 : i32
    return %c0_i32, %c0_i32_0 : i32, i32
  }
  func.func @transform_4(%arg0: i32) -> (i32, i32) {
    %c0_i32 = arith.constant 0 : i32
    %c0_i32_0 = arith.constant 0 : i32
    %c0_i32_1 = arith.constant 0 : i32
    return %c0_i32, %c0_i32_0 : i32, i32
  }
  func.func @transform_5(%arg0: i32) -> (i32, i32) {
    %c0_i32 = arith.constant 0 : i32
    %c0_i32_0 = arith.constant 0 : i32
    %c0_i32_1 = arith.constant 0 : i32
    return %c0_i32, %c0_i32_0 : i32, i32
  }
  func.func @transform_6(%arg0: i32) -> (i32, i32) {
    %c0_i32 = arith.constant 0 : i32
    %c0_i32_0 = arith.constant 0 : i32
    %c0_i32_1 = arith.constant 0 : i32
    return %c0_i32, %c0_i32_0 : i32, i32
  }
  func.func @transform_7(%arg0: i32) -> (i32, i32) {
    %c0_i32 = arith.constant 0 : i32
    %c0_i32_0 = arith.constant 0 : i32
    %c0_i32_1 = arith.constant 0 : i32
    return %c0_i32, %c0_i32_0 : i32, i32
  }
  func.func @transform_8(%arg0: i32) -> (i32, i32) {
    %c0_i32 = arith.constant 0 : i32
    %c0_i32_0 = arith.constant 0 : i32
    %c0_i32_1 = arith.constant 0 : i32
    return %c0_i32, %c0_i32_0 : i32, i32
  }
  func.func @transform_9(%arg0: i32) -> (i32, i32) {
    %c0_i32 = arith.constant 0 : i32
    %c0_i32_0 = arith.constant 0 : i32
    %c0_i32_1 = arith.constant 0 : i32
    return %c0_i32, %c0_i32_0 : i32, i32
  }
  func.func @transform_10(%arg0: i32) -> (i32, i32) {
    %c0_i32 = arith.constant 0 : i32
    %c0_i32_0 = arith.constant 0 : i32
    %c0_i32_1 = arith.constant 0 : i32
    return %c0_i32, %c0_i32_0 : i32, i32
  }
  func.func @transform_11(%arg0: i32) -> (i32, i32) {
    %c0_i32 = arith.constant 0 : i32
    %c0_i32_0 = arith.constant 0 : i32
    %c0_i32_1 = arith.constant 0 : i32
    return %c0_i32, %c0_i32_0 : i32, i32
  }
}

</mosaic_0001>

<llo_original>
// kernel: tpu_custom_call.1
$region0: #{tpu_custom_call.1}
  #allocation0 [shape = 'u32[]', space=smem, size = 0x4, offset = 0x4, fixed_abs, tag = 'smem constant byte address 0x4 - core index']
  #allocation1 [shape = 'u32[72,128]{1,0:T(1,128)}', space=vmem, size = 0x9000, scoped, tag = 'internal scratch']
  #allocation2 [shape = 'f32[1,128]{1,0:T(1,128)}', space=vmem, size = 0x200, scoped, tag = 'scratch operand']
  #allocation3 [shape = 'f32[8,128]{1,0:T(8,128)}', space=vmem, size = 0x1000, scoped, tag = 'scratch operand']
  #allocation4 [shape = 'f32[8,128]{1,0:T(8,128)}', space=vmem, size = 0x1000, scoped, tag = 'scratch operand']
  #allocation5 [shape = 'f32[8,128]{1,0:T(8,128)}', space=vmem, size = 0x1000, scoped, tag = 'scratch operand']
  #allocation6 [shape = 'f32[1]{0:T(128)S(6)}', space=smem, size = 0x200, scoped, tag = 'scoped memory for tpu_custom_call.1']
  %s0 = inlined_call_operand.<no memory space> [shape: f32[1], index: 0, kind: input, shape index: {}]
  %s1 = inlined_call_operand.hbm [shape: f32[256,128], index: 1, kind: input, shape index: {}]
  %s2 = inlined_call_operand.vmem [shape: s32[1,256], index: 2, kind: input, shape index: {}]
  %s3 = inlined_call_operand.hbm [shape: f32[128,128], index: 3, kind: input, shape index: {}]
  %s4 = inlined_call_operand.hbm [shape: f32[128,128], index: 4, kind: input, shape index: {}]
  %s5 = inlined_call_operand.vmem [shape: f32[1,128], index: 5, kind: input, shape index: {}]
  %s6 = inlined_call_operand.hbm [shape: f32[128,128], index: 6, kind: input, shape index: {}]
  %s7 = inlined_call_operand.vmem [shape: f32[1,128], index: 7, kind: input, shape index: {}]
  %s8 = inlined_call_operand.hbm [shape: f32[128,128], index: 8, kind: input, shape index: {}]
  %s9 = inlined_call_operand.vmem [shape: f32[1,128], index: 9, kind: input, shape index: {}]
  %s10 = inlined_call_operand.hbm [shape: f32[8,128], index: 10, kind: output, shape index: {0}]
  %s11 = inlined_call_operand.hbm [shape: f32[8,128], index: 11, kind: output, shape index: {1}]
  %12 = xla_tuple %s10, %s11
  %s13 = sld [smem:[#allocation0]]
  $region109: #{tpu_custom_call.1} parent=0
    _
  %s15 = ssub.s32 1, %s13
  %s16 = scalar_select 0, %s15, %s13
  %17 = sst [smem:[#allocation6]] %s0
  $region1: #{tpu_custom_call.1} parent=0
    #allocation7 [shape = 'u8[131072]{0}', space=vmem, size = 0x20000, scoped, tag = 'input window, operand 1']
    #allocation8 [shape = 's32[2]{0}', space=sflag, size = 0x8, scoped, tag = 'scoped memory for tpu_custom_call.1']
    #allocation9 [shape = 's32[2]{0}', space=sflag, size = 0x8, scoped, tag = 'scoped memory for tpu_custom_call.1']
    #allocation10 [shape = 'u8[65536]{0}', space=vmem, size = 0x10000, scoped, tag = 'input window, operand 3, single buffered']
    #allocation11 [shape = 's32[1]{0}', space=sflag, size = 0x4, scoped, tag = 'scoped memory for tpu_custom_call.1']
    #allocation12 [shape = 'u8[65536]{0}', space=vmem, size = 0x10000, scoped, tag = 'input window, operand 4, single buffered']
    #allocation13 [shape = 'u8[65536]{0}', space=vmem, size = 0x10000, scoped, tag = 'input window, operand 6, single buffered']
    #allocation14 [shape = 's32[1]{0}', space=sflag, size = 0x4, scoped, tag = 'scoped memory for tpu_custom_call.1']
    #allocation15 [shape = 'u8[65536]{0}', space=vmem, size = 0x10000, scoped, tag = 'input window, operand 8, single buffered']
    #allocation16 [shape = 'u8[4096]{0}', space=vmem, size = 0x1000, scoped, tag = 'output window, operand 0, single buffered']
    #allocation17 [shape = 'u8[4096]{0}', space=vmem, size = 0x1000, scoped, tag = 'output window, operand 1, single buffered']
    #allocation18 [shape = 's32[1]{0}', space=sflag, size = 0x4, scoped, tag = 'scoped memory for tpu_custom_call.1']
    %18 = vsyncpa [#allocation8], 0
    %s19 = scalar_lea.sflag [#allocation8], 1
    %20 = vsyncpa %s19, 0
    %21 = vsyncpa [#allocation11], 0
    %22 = vsyncpa [#allocation14], 0
    %23 = vsyncpa [#allocation9], 0
    %24 = vsyncpa [#allocation18], 0
    loop: start=0, step=1, limit=4
    $region2: #{tpu_custom_call.1} parent=1 // loop_pre_header
      _
    $region3: #{tpu_custom_call.1} parent=1 // loop_header
      %s26 = sphi 0, %s30
      %p27 = scmp.ge.s32.totalorder %s26, 4
      %s34 = sphi 0, %s34
      %s36 = sphi 0, %s34
      %s37 = sphi 0, %s36
      %s51 = sphi 0, %s37
      %s57 = sphi 0, %s59
      %s60 = sphi 0, %s57
      %s61 = sphi 0, %s60
      %s77 = sphi 0, %s61
      %s83 = sphi 0, %s85
      %s86 = sphi 0, %s83
      %s87 = sphi 0, %s86
      %s103 = sphi 0, %s87
      %s107 = sphi 0, %s107
      %s109 = sphi 0, %s107
      %s110 = sphi 0, %s109
      %s124 = sphi 0, %s110
      %s128 = sphi 0, %s128
      %s130 = sphi 0, %s128
      %s131 = sphi 0, %s130
      %s145 = sphi 0, %s131
      %s149 = sphi 0, %s149
      %s151 = sphi 0, %s149
      %s152 = sphi 0, %s151
      %s166 = sphi 0, %s152
      %s170 = sphi 0, %s170
      %s172 = sphi 0, %s170
      %s173 = sphi 0, %s172
      %s187 = sphi 0, %s173
      %s191 = sphi 0, %s191
      %s193 = sphi 0, %s191
      %s194 = sphi 0, %s193
      %s208 = sphi 0, %s194
      %s212 = sphi 0, %s212
      %s214 = sphi 0, %s212
      %s215 = sphi 0, %s214
      %s229 = sphi 0, %s215
      %s233 = sphi 0, %s233
      %s235 = sphi 0, %s233
      %s236 = sphi 0, %s235
      %s250 = sphi 0, %s236
      %s254 = sphi 0, %s254
      %s256 = sphi 0, %s254
      %s257 = sphi 0, %s256
      %s271 = sphi 0, %s257
      %s275 = sphi 0, %s275
      %s277 = sphi 0, %s275
      %s278 = sphi 0, %s277
      %s292 = sphi 0, %s278
    $region4: #{tpu_custom_call.1} parent=1 // loop_header_branch
      %29 = sbr.rel (%p27) target = $region8
    $region5: #{tpu_custom_call.1} parent=1 // loop_body
      %s31 = ssub.s32 %s26, 1
      %s32 = ssub.s32 %s26, 2
      %s33 = sadd.s32 %s26, 1
      %s35 = sadd.s32 %s34, 1
      %p38 = scmp.eq.s32.totalorder %s26, 1
      %p39 = scmp.ne.s32.totalorder %s34, %s36
      %p40 = scmp.eq.s32.totalorder %s26, 0
      %p41 = por %p39, %p40
      %p42 = scmp.ne.s32.totalorder %s34, %s36
      %p43 = scmp.eq.s32.totalorder %s31, 1
      %p44 = por %p42, %p43
      %p45 = scmp.ne.s32.totalorder %s36, %s37
      %p46 = scmp.eq.s32.totalorder %s31, 0
      %p47 = por %p45, %p46
      %p48 = scmp.ne.s32.totalorder %s36, %s37
      %p49 = scmp.eq.s32.totalorder %s32, 1
      %p50 = por %p48, %p49
      %p52 = scmp.ne.s32.totalorder %s37, %s51
      %p53 = scmp.eq.s32.totalorder %s32, 0
      %p54 = por %p52, %p53
      %s55 = ssub.s32 %s26, %s33
      %p56 = scmp.eq.s32.totalorder %s55, 0
      %s58 = sadd.s32 %s57, 1
      %s59 = scalar_select %p56, %s57, %s58
      %p62 = pneg %p56
      %p63 = scmp.eq.s32.totalorder %s26, 1
      %p64 = por %p62, %p63
      %p65 = scmp.ne.s32.totalorder %s57, %s60
      %p66 = scmp.eq.s32.totalorder %s26, 0
      %p67 = por %p65, %p66
      %p68 = scmp.ne.s32.totalorder %s57, %s60
      %p69 = scmp.eq.s32.totalorder %s31, 1
      %p70 = por %p68, %p69
      %p71 = scmp.ne.s32.totalorder %s60, %s61
      %p72 = scmp.eq.s32.totalorder %s31, 0
      %p73 = por %p71, %p72
      %p74 = scmp.ne.s32.totalorder %s60, %s61
      %p75 = scmp.eq.s32.totalorder %s32, 1
      %p76 = por %p74, %p75
      %p78 = scmp.ne.s32.totalorder %s61, %s77
      %p79 = scmp.eq.s32.totalorder %s32, 0
      %p80 = por %p78, %p79
      %s81 = ssub.s32 %s26, %s33
      %p82 = scmp.eq.s32.totalorder %s81, 0
      %s84 = sadd.s32 %s83, 1
      %s85 = scalar_select %p82, %s83, %s84
      %p88 = pneg %p82
      %p89 = scmp.eq.s32.totalorder %s26, 1
      %p90 = por %p88, %p89
      %p91 = scmp.ne.s32.totalorder %s83, %s86
      %p92 = scmp.eq.s32.totalorder %s26, 0
      %p93 = por %p91, %p92
      %p94 = scmp.ne.s32.totalorder %s83, %s86
      %p95 = scmp.eq.s32.totalorder %s31, 1
      %p96 = por %p94, %p95
      %p97 = scmp.ne.s32.totalorder %s86, %s87
      %p98 = scmp.eq.s32.totalorder %s31, 0
      %p99 = por %p97, %p98
      %p100 = scmp.ne.s32.totalorder %s86, %s87
      %p101 = scmp.eq.s32.totalorder %s32, 1
      %p102 = por %p100, %p101
      %p104 = scmp.ne.s32.totalorder %s87, %s103
      %p105 = scmp.eq.s32.totalorder %s32, 0
      %p106 = por %p104, %p105
      %s108 = sadd.s32 %s107, 1
      %p111 = scmp.eq.s32.totalorder %s26, 1
      %p112 = scmp.ne.s32.totalorder %s107, %s109
      %p113 = scmp.eq.s32.totalorder %s26, 0
      %p114 = por %p112, %p113
      %p115 = scmp.ne.s32.totalorder %s107, %s109
      %p116 = scmp.eq.s32.totalorder %s31, 1
      %p117 = por %p115, %p116
      %p118 = scmp.ne.s32.totalorder %s109, %s110
      %p119 = scmp.eq.s32.totalorder %s31, 0
      %p120 = por %p118, %p119
      %p121 = scmp.ne.s32.totalorder %s109, %s110
      %p122 = scmp.eq.s32.totalorder %s32, 1
      %p123 = por %p121, %p122
      %p125 = scmp.ne.s32.totalorder %s110, %s124
      %p126 = scmp.eq.s32.totalorder %s32, 0
      %p127 = por %p125, %p126
      %s129 = sadd.s32 %s128, 1
      %p132 = scmp.eq.s32.totalorder %s26, 1
      %p133 = scmp.ne.s32.totalorder %s128, %s130
      %p134 = scmp.eq.s32.totalorder %s26, 0
      %p135 = por %p133, %p134
      %p136 = scmp.ne.s32.totalorder %s128, %s130
      %p137 = scmp.eq.s32.totalorder %s31, 1
      %p138 = por %p136, %p137
      %p139 = scmp.ne.s32.totalorder %s130, %s131
      %p140 = scmp.eq.s32.totalorder %s31, 0
      %p141 = por %p139, %p140
      %p142 = scmp.ne.s32.totalorder %s130, %s131
      %p143 = scmp.eq.s32.totalorder %s32, 1
      %p144 = por %p142, %p143
      %p146 = scmp.ne.s32.totalorder %s131, %s145
      %p147 = scmp.eq.s32.totalorder %s32, 0
      %p148 = por %p146, %p147
      %s150 = sadd.s32 %s149, 1
      %p153 = scmp.eq.s32.totalorder %s26, 1
      %p154 = scmp.ne.s32.totalorder %s149, %s151
      %p155 = scmp.eq.s32.totalorder %s26, 0
      %p156 = por %p154, %p155
      %p157 = scmp.ne.s32.totalorder %s149, %s151
      %p158 = scmp.eq.s32.totalorder %s31, 1
      %p159 = por %p157, %p158
      %p160 = scmp.ne.s32.totalorder %s151, %s152
      %p161 = scmp.eq.s32.totalorder %s31, 0
      %p162 = por %p160, %p161
      %p163 = scmp.ne.s32.totalorder %s151, %s152
      %p164 = scmp.eq.s32.totalorder %s32, 1
      %p165 = por %p163, %p164
      %p167 = scmp.ne.s32.totalorder %s152, %s166
      %p168 = scmp.eq.s32.totalorder %s32, 0
      %p169 = por %p167, %p168
      %s171 = sadd.s32 %s170, 1
      %p174 = scmp.eq.s32.totalorder %s26, 1
      %p175 = scmp.ne.s32.totalorder %s170, %s172
      %p176 = scmp.eq.s32.totalorder %s26, 0
      %p177 = por %p175, %p176
      %p178 = scmp.ne.s32.totalorder %s170, %s172
      %p179 = scmp.eq.s32.totalorder %s31, 1
      %p180 = por %p178, %p179
      %p181 = scmp.ne.s32.totalorder %s172, %s173
      %p182 = scmp.eq.s32.totalorder %s31, 0
      %p183 = por %p181, %p182
      %p184 = scmp.ne.s32.totalorder %s172, %s173
      %p185 = scmp.eq.s32.totalorder %s32, 1
      %p186 = por %p184, %p185
      %p188 = scmp.ne.s32.totalorder %s173, %s187
      %p189 = scmp.eq.s32.totalorder %s32, 0
      %p190 = por %p188, %p189
      %s192 = sadd.s32 %s191, 1
      %p195 = scmp.eq.s32.totalorder %s26, 1
      %p196 = scmp.ne.s32.totalorder %s191, %s193
      %p197 = scmp.eq.s32.totalorder %s26, 0
      %p198 = por %p196, %p197
      %p199 = scmp.ne.s32.totalorder %s191, %s193
      %p200 = scmp.eq.s32.totalorder %s31, 1
      %p201 = por %p199, %p200
      %p202 = scmp.ne.s32.totalorder %s193, %s194
      %p203 = scmp.eq.s32.totalorder %s31, 0
      %p204 = por %p202, %p203
      %p205 = scmp.ne.s32.totalorder %s193, %s194
      %p206 = scmp.eq.s32.totalorder %s32, 1
      %p207 = por %p205, %p206
      %p209 = scmp.ne.s32.totalorder %s194, %s208
      %p210 = scmp.eq.s32.totalorder %s32, 0
      %p211 = por %p209, %p210
      %s213 = sadd.s32 %s212, 1
      %p216 = scmp.eq.s32.totalorder %s26, 1
      %p217 = scmp.ne.s32.totalorder %s212, %s214
      %p218 = scmp.eq.s32.totalorder %s26, 0
      %p219 = por %p217, %p218
      %p220 = scmp.ne.s32.totalorder %s212, %s214
      %p221 = scmp.eq.s32.totalorder %s31, 1
      %p222 = por %p220, %p221
      %p223 = scmp.ne.s32.totalorder %s214, %s215
      %p224 = scmp.eq.s32.totalorder %s31, 0
      %p225 = por %p223, %p224
      %p226 = scmp.ne.s32.totalorder %s214, %s215
      %p227 = scmp.eq.s32.totalorder %s32, 1
      %p228 = por %p226, %p227
      %p230 = scmp.ne.s32.totalorder %s215, %s229
      %p231 = scmp.eq.s32.totalorder %s32, 0
      %p232 = por %p230, %p231
      %s234 = sadd.s32 %s233, 1
      %p237 = scmp.eq.s32.totalorder %s26, 1
      %p238 = scmp.ne.s32.totalorder %s233, %s235
      %p239 = scmp.eq.s32.totalorder %s26, 0
      %p240 = por %p238, %p239
      %p241 = scmp.ne.s32.totalorder %s233, %s235
      %p242 = scmp.eq.s32.totalorder %s31, 1
      %p243 = por %p241, %p242
      %p244 = scmp.ne.s32.totalorder %s235, %s236
      %p245 = scmp.eq.s32.totalorder %s31, 0
      %p246 = por %p244, %p245
      %p247 = scmp.ne.s32.totalorder %s235, %s236
      %p248 = scmp.eq.s32.totalorder %s32, 1
      %p249 = por %p247, %p248
      %p251 = scmp.ne.s32.totalorder %s236, %s250
      %p252 = scmp.eq.s32.totalorder %s32, 0
      %p253 = por %p251, %p252
      %s255 = sadd.s32 %s254, 1
      %p258 = scmp.eq.s32.totalorder %s26, 1
      %p259 = scmp.ne.s32.totalorder %s254, %s256
      %p260 = scmp.eq.s32.totalorder %s26, 0
      %p261 = por %p259, %p260
      %p262 = scmp.ne.s32.totalorder %s254, %s256
      %p263 = scmp.eq.s32.totalorder %s31, 1
      %p264 = por %p262, %p263
      %p265 = scmp.ne.s32.totalorder %s256, %s257
      %p266 = scmp.eq.s32.totalorder %s31, 0
      %p267 = por %p265, %p266
      %p268 = scmp.ne.s32.totalorder %s256, %s257
      %p269 = scmp.eq.s32.totalorder %s32, 1
      %p270 = por %p268, %p269
      %p272 = scmp.ne.s32.totalorder %s257, %s271
      %p273 = scmp.eq.s32.totalorder %s32, 0
      %p274 = por %p272, %p273
      %s276 = sadd.s32 %s275, 1
      %p279 = scmp.eq.s32.totalorder %s26, 1
      %p280 = scmp.ne.s32.totalorder %s275, %s277
      %p281 = scmp.eq.s32.totalorder %s26, 0
      %p282 = por %p280, %p281
      %p283 = scmp.ne.s32.totalorder %s275, %s277
      %p284 = scmp.eq.s32.totalorder %s31, 1
      %p285 = por %p283, %p284
      %p286 = scmp.ne.s32.totalorder %s277, %s278
      %p287 = scmp.eq.s32.totalorder %s31, 0
      %p288 = por %p286, %p287
      %p289 = scmp.ne.s32.totalorder %s277, %s278
      %p290 = scmp.eq.s32.totalorder %s32, 1
      %p291 = por %p289, %p290
      %p293 = scmp.ne.s32.totalorder %s278, %s292
      %p294 = scmp.eq.s32.totalorder %s32, 0
      %p295 = por %p293, %p294
      %p296 = scmp.le.s32.totalorder 1, %s26
      %p297 = scmp.lt.s32.totalorder %s26, 3
      %p298 = pnand %p296, %p297
      %p299 = pneg %p298
      // Predicated region
      $region9: #{tpu_custom_call.1} parent=5 // pred_check
        _
      $region10: #{tpu_custom_call.1} parent=5 // pred_check_branch
        %301 = sbr.rel (%p298) target = $region12
      $region11: #{tpu_custom_call.1} parent=5 // pred_region
        %s302 = ssub.s32 %s26, 1
        // Predicated region
        $region13: #{tpu_custom_call.1} parent=11 // pred_check
          %p303 = pneg %p47
        $region14: #{tpu_custom_call.1} parent=11 // pred_check_branch
          %305 = sbr.rel (%p303) target = $region16
        $region15: #{tpu_custom_call.1} parent=11 // pred_region
          _
        $region16: #{tpu_custom_call.1} parent=11 // pred_fallthru
          _
        // Predicated region
        $region17: #{tpu_custom_call.1} parent=11 // pred_check
          %p306 = pneg %p120
        $region18: #{tpu_custom_call.1} parent=11 // pred_check_branch
          %308 = sbr.rel (%p306) target = $region20
        $region19: #{tpu_custom_call.1} parent=11 // pred_region
          %310 = vsyncadd [#allocation11], 0
          %s311 = sshll.u32 %s3, 4
          %s312 = int_to_ptr.hbm [resolvable:$true] %s311
          %s313 = sshll.u32 [#allocation10], 4
          %s314 = int_to_ptr.vmem [resolvable:$true] %s313
          %319 = dma.hbm_to_vmem [thread:$0]  %s312, 2048, %s314, [#allocation11], 128, 128, 8
        $region20: #{tpu_custom_call.1} parent=11 // pred_fallthru
          _
        // Predicated region
        $region21: #{tpu_custom_call.1} parent=11 // pred_check
          %p320 = pneg %p141
        $region22: #{tpu_custom_call.1} parent=11 // pred_check_branch
          %322 = sbr.rel (%p320) target = $region24
        $region23: #{tpu_custom_call.1} parent=11 // pred_region
          %324 = vsyncadd [#allocation11], 0
          %s325 = sshll.u32 %s4, 4
          %s326 = int_to_ptr.hbm [resolvable:$true] %s325
          %s327 = sshll.u32 [#allocation12], 4
          %s328 = int_to_ptr.vmem [resolvable:$true] %s327
          %333 = dma.hbm_to_vmem [thread:$0]  %s326, 2048, %s328, [#allocation11], 128, 128, 8
        $region24: #{tpu_custom_call.1} parent=11 // pred_fallthru
          _
        // Predicated region
        $region25: #{tpu_custom_call.1} parent=11 // pred_check
          %p334 = pneg %p162
        $region26: #{tpu_custom_call.1} parent=11 // pred_check_branch
          %336 = sbr.rel (%p334) target = $region28
        $region27: #{tpu_custom_call.1} parent=11 // pred_region
          _
        $region28: #{tpu_custom_call.1} parent=11 // pred_fallthru
          _
        // Predicated region
        $region29: #{tpu_custom_call.1} parent=11 // pred_check
          %p337 = pneg %p183
        $region30: #{tpu_custom_call.1} parent=11 // pred_check_branch
          %339 = sbr.rel (%p337) target = $region32
        $region31: #{tpu_custom_call.1} parent=11 // pred_region
          %341 = vsyncadd [#allocation14], 0
          %s342 = sshll.u32 %s6, 4
          %s343 = int_to_ptr.hbm [resolvable:$true] %s342
          %s344 = sshll.u32 [#allocation13], 4
          %s345 = int_to_ptr.vmem [resolvable:$true] %s344
          %350 = dma.hbm_to_vmem [thread:$0]  %s343, 2048, %s345, [#allocation14], 128, 128, 8
        $region32: #{tpu_custom_call.1} parent=11 // pred_fallthru
          _
        // Predicated region
        $region33: #{tpu_custom_call.1} parent=11 // pred_check
          %p351 = pneg %p204
        $region34: #{tpu_custom_call.1} parent=11 // pred_check_branch
          %353 = sbr.rel (%p351) target = $region36
        $region35: #{tpu_custom_call.1} parent=11 // pred_region
          _
        $region36: #{tpu_custom_call.1} parent=11 // pred_fallthru
          _
        // Predicated region
        $region37: #{tpu_custom_call.1} parent=11 // pred_check
          %p354 = pneg %p225
        $region38: #{tpu_custom_call.1} parent=11 // pred_check_branch
          %356 = sbr.rel (%p354) target = $region40
        $region39: #{tpu_custom_call.1} parent=11 // pred_region
          %358 = vsyncadd [#allocation14], 0
          %s359 = sshll.u32 %s8, 4
          %s360 = int_to_ptr.hbm [resolvable:$true] %s359
          %s361 = sshll.u32 [#allocation15], 4
          %s362 = int_to_ptr.vmem [resolvable:$true] %s361
          %367 = dma.hbm_to_vmem [thread:$0]  %s360, 2048, %s362, [#allocation14], 128, 128, 8
        $region40: #{tpu_custom_call.1} parent=11 // pred_fallthru
          _
        // Predicated region
        $region41: #{tpu_custom_call.1} parent=11 // pred_check
          %p368 = pneg %p246
        $region42: #{tpu_custom_call.1} parent=11 // pred_check_branch
          %370 = sbr.rel (%p368) target = $region44
        $region43: #{tpu_custom_call.1} parent=11 // pred_region
          _
        $region44: #{tpu_custom_call.1} parent=11 // pred_fallthru
          _
      $region12: #{tpu_custom_call.1} parent=5 // pred_fallthru
        _
      %p371 = scmp.lt.s32.totalorder %s26, 2
      // Predicated region
      $region45: #{tpu_custom_call.1} parent=5 // pred_check
        %p372 = pneg %p371
      $region46: #{tpu_custom_call.1} parent=5 // pred_check_branch
        %374 = sbr.rel (%p372) target = $region48
      $region47: #{tpu_custom_call.1} parent=5 // pred_region
        // Predicated region
        $region49: #{tpu_custom_call.1} parent=47 // pred_check
          %p375 = pneg %p67
        $region50: #{tpu_custom_call.1} parent=47 // pred_check_branch
          %377 = sbr.rel (%p375) target = $region52
        $region51: #{tpu_custom_call.1} parent=47 // pred_region
          %s378 = sand.u32 %s57, 1
          %s379 = scalar_lea.sflag [#allocation8], %s378
          %s380 = sand.u32 %s57, 1
          %s381 = smul.addr %s380, 128
          %s382 = scalar_lea.vmem [#allocation7], %s381
          %s383 = smul.u32 16, %s26
          %385 = vsyncadd %s379, 0
          %s386 = smul.addr %s383, 8
          %s387 = scalar_lea.hbm %s1, %s386
          %s388 = sshll.u32 %s387, 4
          %s389 = int_to_ptr.hbm [resolvable:$true] %s388
          %s390 = sshll.u32 %s382, 4
          %s391 = int_to_ptr.vmem [resolvable:$true] %s390
          %396 = dma.hbm_to_vmem [thread:$0]  %s389, 2048, %s391, %s379, 128, 128, 8
        $region52: #{tpu_custom_call.1} parent=47 // pred_fallthru
          _
        // Predicated region
        $region53: #{tpu_custom_call.1} parent=47 // pred_check
          %p397 = pneg %p93
        $region54: #{tpu_custom_call.1} parent=47 // pred_check_branch
          %399 = sbr.rel (%p397) target = $region56
        $region55: #{tpu_custom_call.1} parent=47 // pred_region
          %p400 = scmp.lt.s32.totalorder %s26, 1
          %s401 = scalar_select %p400, %s26, 1
          %s402 = scalar_lea.vmem %s2, %s401
        $region56: #{tpu_custom_call.1} parent=47 // pred_fallthru
          _
      $region48: #{tpu_custom_call.1} parent=5 // pred_fallthru
        _
      %p403 = scmp.le.s32.totalorder 1, %s26
      %p404 = scmp.lt.s32.totalorder %s26, 3
      %p405 = pnand %p403, %p404
      %p406 = pneg %p405
      // Predicated region
      $region57: #{tpu_custom_call.1} parent=5 // pred_check
        _
      $region58: #{tpu_custom_call.1} parent=5 // pred_check_branch
        %408 = sbr.rel (%p405) target = $region60
      $region59: #{tpu_custom_call.1} parent=5 // pred_region
        %s409 = ssub.s32 %s26, 1
        %s410 = sand.u32 %s60, 1
        %s411 = scalar_lea.sflag [#allocation8], %s410
        %s412 = sand.u32 %s60, 1
        %s413 = smul.addr %s412, 128
        %s414 = scalar_lea.vmem [#allocation7], %s413
        // Predicated region
        $region61: #{tpu_custom_call.1} parent=59 // pred_check
          %p415 = pneg %p73
        $region62: #{tpu_custom_call.1} parent=59 // pred_check_branch
          %417 = sbr.rel (%p415) target = $region64
        $region63: #{tpu_custom_call.1} parent=59 // pred_region
          %419 = dma.done %s411, 2048
        $region64: #{tpu_custom_call.1} parent=59 // pred_fallthru
          _
        // Predicated region
        $region65: #{tpu_custom_call.1} parent=59 // pred_check
          %p420 = pneg %p120
        $region66: #{tpu_custom_call.1} parent=59 // pred_check_branch
          %422 = sbr.rel (%p420) target = $region68
        $region67: #{tpu_custom_call.1} parent=59 // pred_region
          %424 = dma.done [#allocation11], 2048
        $region68: #{tpu_custom_call.1} parent=59 // pred_fallthru
          _
        // Predicated region
        $region69: #{tpu_custom_call.1} parent=59 // pred_check
          %p425 = pneg %p141
        $region70: #{tpu_custom_call.1} parent=59 // pred_check_branch
          %427 = sbr.rel (%p425) target = $region72
        $region71: #{tpu_custom_call.1} parent=59 // pred_region
          %429 = dma.done [#allocation11], 2048
        $region72: #{tpu_custom_call.1} parent=59 // pred_fallthru
          _
        // Predicated region
        $region73: #{tpu_custom_call.1} parent=59 // pred_check
          %p430 = pneg %p183
        $region74: #{tpu_custom_call.1} parent=59 // pred_check_branch
          %432 = sbr.rel (%p430) target = $region76
        $region75: #{tpu_custom_call.1} parent=59 // pred_region
          %434 = dma.done [#allocation14], 2048
        $region76: #{tpu_custom_call.1} parent=59 // pred_fallthru
          _
        // Predicated region
        $region77: #{tpu_custom_call.1} parent=59 // pred_check
          %p435 = pneg %p225
        $region78: #{tpu_custom_call.1} parent=59 // pred_check_branch
          %437 = sbr.rel (%p435) target = $region80
        $region79: #{tpu_custom_call.1} parent=59 // pred_region
          %439 = dma.done [#allocation14], 2048
        $region80: #{tpu_custom_call.1} parent=59 // pred_fallthru
          _
        %p440 = pneg %p47
        %p441 = pneg %p44
        %s442 = sand.u32 %s60, 1
        %s443 = scalar_lea.sflag [#allocation8], %s442
        %s444 = sand.u32 %s60, 1
        %s445 = smul.addr %s444, 128
        %s446 = scalar_lea.vmem [#allocation7], %s445
        %p447 = pneg %p73
        %p448 = pneg %p70
        %p449 = scmp.lt.s32.totalorder %s31, 1
        %s450 = scalar_select %p449, %s31, 1
        %s451 = scalar_lea.vmem %s2, %s450
        %p452 = pneg %p99
        %p453 = pneg %p96
        %p454 = pneg %p120
        %p455 = pneg %p117
        %p456 = pneg %p141
        %p457 = pneg %p138
        %p458 = pneg %p162
        %p459 = pneg %p159
        %p460 = pneg %p183
        %p461 = pneg %p180
        %p462 = pneg %p204
        %p463 = pneg %p201
        %p464 = pneg %p225
        %p465 = pneg %p222
        %p466 = pneg %p246
        %p467 = pneg %p243
        %p468 = pneg %p267
        %p469 = pneg %p264
        %p470 = pneg %p288
        %p471 = pneg %p285
        %s472 = smul.u32 16, %s31
        %p473 = scmp.lt.s32.totalorder %s31, 1
        %s474 = scalar_select %p473, %s31, 1
        %s475 = scalar_lea.vmem %s2, %s474
        %p476 = scmp.eq.s32.totalorder %s31, 0
        // Predicated region
        $region81: #{tpu_custom_call.1} parent=59 // pred_check
          %p477 = pneg %p476
        $region82: #{tpu_custom_call.1} parent=59 // pred_check_branch
          %479 = sbr.rel (%p477) target = $region84
        $region83: #{tpu_custom_call.1} parent=59 // pred_region
          %480 = vst [vmem:[#allocation2] sm:$0x1] -1e+30
          %481 = vst [vmem:[#allocation3] sm:$0xff] 0.0
          %482 = vst [vmem:[#allocation4] sm:$0xff] 0.0
          %483 = vst [vmem:[#allocation5] sm:$0xff] 0.0
        $region84: #{tpu_custom_call.1} parent=59 // pred_fallthru
          _
        %v484 = vld [vmem:[%s414] sm:$0xff]
        %v485 = vld [vmem:[%s414 + $0x8] sm:$0xff]
        %v486 = vld [vmem:[%s414 + $0x10] sm:$0xff]
        %v487 = vld [vmem:[%s414 + $0x18] sm:$0xff]
        %v488 = vld [vmem:[%s414 + $0x20] sm:$0xff]
        %v489 = vld [vmem:[%s414 + $0x28] sm:$0xff]
        %v490 = vld [vmem:[%s414 + $0x30] sm:$0xff]
        %v491 = vld [vmem:[%s414 + $0x38] sm:$0xff]
        %v492 = vld [vmem:[%s414 + $0x40] sm:$0xff]
        %v493 = vld [vmem:[%s414 + $0x48] sm:$0xff]
        %v494 = vld [vmem:[%s414 + $0x50] sm:$0xff]
        %v495 = vld [vmem:[%s414 + $0x58] sm:$0xff]
        %v496 = vld [vmem:[%s414 + $0x60] sm:$0xff]
        %v497 = vld [vmem:[%s414 + $0x68] sm:$0xff]
        %v498 = vld [vmem:[%s414 + $0x70] sm:$0xff]
        %v499 = vld [vmem:[%s414 + $0x78] sm:$0xff]
        %s500 = sld [smem:[#allocation6]]
        %v501 = vstv %s500
        %v502 = vmul.f32 %v484, %v501
        %v503 = vmul.f32 %v485, %v501
        %v504 = vmul.f32 %v486, %v501
        %v505 = vmul.f32 %v487, %v501
        %v506 = vmul.f32 %v488, %v501
        %v507 = vmul.f32 %v489, %v501
        %v508 = vmul.f32 %v490, %v501
        %v509 = vmul.f32 %v491, %v501
        %v510 = vmul.f32 %v492, %v501
        %v511 = vmul.f32 %v493, %v501
        %v512 = vmul.f32 %v494, %v501
        %v513 = vmul.f32 %v495, %v501
        %v514 = vmul.f32 %v496, %v501
        %v515 = vmul.f32 %v497, %v501
        %v516 = vmul.f32 %v498, %v501
        %v517 = vmul.f32 %v499, %v501
        %v518 = vld [vmem:[%s475] sm:$0x1]
        %v519 = vlaneseq
        %v520 = vshrl.u32 %v519, 7
        %v521 = vperm.slane %v518, 0
        %vm522 = vcmp.eq.s32.totalorder %v521, %v520
        %v523 = vsel %vm522, 1, 0
        %v524 = vcvt.s32.f32 %v523
        %v525 = vld [vmem:[#allocation2] sm:$0x1]
        %v526 = vmax.f32 %v502, %v506
        %v527 = vmax.f32 %v503, %v507
        %v528 = vmax.f32 %v504, %v508
        %v529 = vmax.f32 %v505, %v509
        %v530 = vmax.f32 %v526, %v510
        %v531 = vmax.f32 %v527, %v511
        %v532 = vmax.f32 %v528, %v512
        %v533 = vmax.f32 %v529, %v513
        %v534 = vmax.f32 %v530, %v514
        %v535 = vmax.f32 %v531, %v515
        %v536 = vmax.f32 %v532, %v516
        %v537 = vmax.f32 %v533, %v517
        %v538 = vmax.f32 %v534, %v535
        %v539 = vmax.f32 %v536, %v537
        %v540 = vmax.f32 %v538, %v539
        %v541 = vrot.slane %v540, 4
        %v542 = vmax.f32 %v540, %v541
        %v543 = vrot.slane %v542, 2
        %v544 = vmax.f32 %v542, %v543
        %v545 = vrot.slane %v544, 1
        %v546 = vmax.f32 %v544, %v545
        %v547 = vmax.f32 %v525, %v546
        %v548 = vsub.f32 %v525, %v547
        %v549 = vmul.f32 %v548, 1.442695
        %v550 = vpow.pop %v549
        %v552 = vperm.slane %v547, 0
        %v554 = vsub.f32 %v502, %v552
        %v555 = vsub.f32 %v503, %v552
        %v556 = vsub.f32 %v504, %v552
        %v557 = vsub.f32 %v505, %v552
        %v558 = vsub.f32 %v506, %v552
        %v559 = vsub.f32 %v507, %v552
        %v560 = vsub.f32 %v508, %v552
        %v561 = vsub.f32 %v509, %v552
        %v562 = vsub.f32 %v510, %v552
        %v563 = vsub.f32 %v511, %v552
        %v564 = vsub.f32 %v512, %v552
        %v565 = vsub.f32 %v513, %v552
        %v566 = vsub.f32 %v514, %v552
        %v567 = vsub.f32 %v515, %v552
        %v568 = vsub.f32 %v516, %v552
        %v569 = vsub.f32 %v517, %v552
        %v570 = vmul.f32 %v554, 1.442695
        %v571 = vpow.pop %v570
        %v572 = vmul.f32 %v555, 1.442695
        %v573 = vpow.pop %v572
        %v574 = vmul.f32 %v556, 1.442695
        %v575 = vpow.pop %v574
        %v576 = vmul.f32 %v557, 1.442695
        %v577 = vpow.pop %v576
        %v578 = vmul.f32 %v558, 1.442695
        %v579 = vpow.pop %v578
        %v580 = vmul.f32 %v559, 1.442695
        %v581 = vpow.pop %v580
        %v582 = vmul.f32 %v560, 1.442695
        %v583 = vpow.pop %v582
        %v584 = vmul.f32 %v561, 1.442695
        %v585 = vpow.pop %v584
        %v586 = vmul.f32 %v562, 1.442695
        %v587 = vpow.pop %v586
        %v588 = vmul.f32 %v563, 1.442695
        %v589 = vpow.pop %v588
        %v590 = vmul.f32 %v564, 1.442695
        %v591 = vpow.pop %v590
        %v592 = vmul.f32 %v565, 1.442695
        %v593 = vpow.pop %v592
        %v594 = vmul.f32 %v566, 1.442695
        %v595 = vpow.pop %v594
        %v596 = vmul.f32 %v567, 1.442695
        %v597 = vpow.pop %v596
        %v598 = vmul.f32 %v568, 1.442695
        %v599 = vpow.pop %v598
        %v600 = vmul.f32 %v569, 1.442695
        %v601 = vpow.pop %v600
        %602 = vmatpush.msra.mxu0 %v601
        %603 = vmatpush.msra.mxu0 %v599
        %604 = vmatpush.msra.mxu0 %v597
        %605 = vmatpush.msra.mxu0 %v595
        %606 = vmatpush.msra.mxu0 %v593
        %607 = vmatpush.msra.mxu0 %v591
        %608 = vmatpush.msra.mxu0 %v589
        %609 = vmatpush.msra.mxu0 %v587
        %610 = vmatpush.msra.mxu0 %v585
        %611 = vmatpush.msra.mxu0 %v583
        %612 = vmatpush.msra.mxu0 %v581
        %613 = vmatpush.msra.mxu0 %v579
        %614 = vmatpush.msra.mxu0 %v577
        %615 = vmatpush.msra.mxu0 %v575
        %616 = vmatpush.msra.mxu0 %v573
        %617 = vmatpush.msra.mxu0 %v571
        %618 = vmatmul.f32.gmra.mxu0 %v524
        %v619 = vpop.f32.mrf.mxu0
        %v620 = vadd.f32 0.0, %v619
        %621 = vdwg.mxu0
        %v622 = vmul.f32 %v571, %v484
        %v623 = vmul.f32 %v573, %v485
        %v624 = vmul.f32 %v575, %v486
        %v625 = vmul.f32 %v577, %v487
        %v626 = vmul.f32 %v579, %v488
        %v627 = vmul.f32 %v581, %v489
        %v628 = vmul.f32 %v583, %v490
        %v629 = vmul.f32 %v585, %v491
        %v630 = vmul.f32 %v587, %v492
        %v631 = vmul.f32 %v589, %v493
        %v632 = vmul.f32 %v591, %v494
        %v633 = vmul.f32 %v593, %v495
        %v634 = vmul.f32 %v595, %v496
        %v635 = vmul.f32 %v597, %v497
        %v636 = vmul.f32 %v599, %v498
        %v637 = vmul.f32 %v601, %v499
        %638 = vmatpush.msra.mxu0 %v637
        %639 = vmatpush.msra.mxu0 %v636
        %640 = vmatpush.msra.mxu0 %v635
        %641 = vmatpush.msra.mxu0 %v634
        %642 = vmatpush.msra.mxu0 %v633
        %643 = vmatpush.msra.mxu0 %v632
        %644 = vmatpush.msra.mxu0 %v631
        %645 = vmatpush.msra.mxu0 %v630
        %646 = vmatpush.msra.mxu0 %v629
        %647 = vmatpush.msra.mxu0 %v628
        %648 = vmatpush.msra.mxu0 %v627
        %649 = vmatpush.msra.mxu0 %v626
        %650 = vmatpush.msra.mxu0 %v625
        %651 = vmatpush.msra.mxu0 %v624
        %652 = vmatpush.msra.mxu0 %v623
        %653 = vmatpush.msra.mxu0 %v622
        %654 = vmatmul.f32.gmra.mxu0 %v524
        %v655 = vpop.f32.mrf.mxu0
        %v656 = vadd.f32 0.0, %v655
        %657 = vdwg.mxu0
        %658 = vmatpush.msra.mxu0 %v499
        %659 = vmatpush.msra.mxu0 %v498
        %660 = vmatpush.msra.mxu0 %v497
        %661 = vmatpush.msra.mxu0 %v496
        %662 = vmatpush.msra.mxu0 %v495
        %663 = vmatpush.msra.mxu0 %v494
        %664 = vmatpush.msra.mxu0 %v493
        %665 = vmatpush.msra.mxu0 %v492
        %666 = vmatpush.msra.mxu0 %v491
        %667 = vmatpush.msra.mxu0 %v490
        %668 = vmatpush.msra.mxu0 %v489
        %669 = vmatpush.msra.mxu0 %v488
        %670 = vmatpush.msra.mxu0 %v487
        %671 = vmatpush.msra.mxu0 %v486
        %672 = vmatpush.msra.mxu0 %v485
        %673 = vmatpush.msra.mxu0 %v484
        %674 = vmatmul.f32.gmra.mxu0 %v524
        %v675 = vpop.f32.mrf.mxu0
        %v676 = vadd.f32 0.0, %v675
        %677 = vdwg.mxu0
        %678 = vst [vmem:[#allocation2] sm:$0x1] %v547
        %v679 = vld [vmem:[#allocation3] sm:$0xff]
        %v681 = vperm.slane %v550, 0
        %v683 = vmul.f32 %v681, %v679
        %v684 = vadd.f32 %v683, %v620
        %685 = vst [vmem:[#allocation3] sm:$0xff] %v684
        %v686 = vld [vmem:[#allocation4] sm:$0xff]
        %v687 = vmul.f32 %v681, %v686
        %v688 = vadd.f32 %v687, %v656
        %689 = vst [vmem:[#allocation4] sm:$0xff] %v688
        %v690 = vld [vmem:[#allocation5] sm:$0xff]
        %v691 = vadd.f32 %v690, %v676
        %692 = vst [vmem:[#allocation5] sm:$0xff] %v691
        %p693 = scmp.eq.s32.totalorder %s31, 1
        // Predicated region
        $region85: #{tpu_custom_call.1} parent=59 // pred_check
          %p694 = pneg %p693
        $region86: #{tpu_custom_call.1} parent=59 // pred_check_branch
          %696 = sbr.rel (%p694) target = $region88
        $region87: #{tpu_custom_call.1} parent=59 // pred_region
          %v697 = vld [vmem:[#allocation3] sm:$0xff]
          %v698 = vld [vmem:[#allocation4] sm:$0xff]
          %v699 = vmax.f32 %v697, 1e-30
          %v700 = vrcp.pop %v699
          %v701 = vmul.f32 %v699, %v700
          %v702 = vsub.f32 1.0, %v701
          %v703 = vmul.f32 %v700, %v702
          %v704 = vadd.f32 %v700, %v703
          %vm705 = vweird.f32 %v699
          %vm706 = vweird.f32 %v700
          %vm707 = vmor %vm705, %vm706
          %v708 = vsel %vm707, %v700, %v704
          %v709 = vand.u32 2147483647, %v699
          %vm710 = vcmp.eq.f32.partialorder %v709, 8.507059e+37
          %v711 = vand.u32 %v699, 2147483648
          %v712 = vor.u32 1.1754944e-38, %v711
          %v713 = vsel %vm710, %v712, %v708
          %v714 = vmul.f32 %v698, %v713
          %v715 = vld [vmem:[#allocation5] sm:$0xff]
          %v716 = vld [vmem:[#allocation10] sm:$0xff]
          %v717 = vld [vmem:[#allocation10 + $0x8] sm:$0xff]
          %v718 = vld [vmem:[#allocation10 + $0x10] sm:$0xff]
          %v719 = vld [vmem:[#allocation10 + $0x18] sm:$0xff]
          %v720 = vld [vmem:[#allocation10 + $0x20] sm:$0xff]
          %v721 = vld [vmem:[#allocation10 + $0x28] sm:$0xff]
          %v722 = vld [vmem:[#allocation10 + $0x30] sm:$0xff]
          %v723 = vld [vmem:[#allocation10 + $0x38] sm:$0xff]
          %v724 = vld [vmem:[#allocation10 + $0x40] sm:$0xff]
          %v725 = vld [vmem:[#allocation10 + $0x48] sm:$0xff]
          %v726 = vld [vmem:[#allocation10 + $0x50] sm:$0xff]
          %v727 = vld [vmem:[#allocation10 + $0x58] sm:$0xff]
          %v728 = vld [vmem:[#allocation10 + $0x60] sm:$0xff]
          %v729 = vld [vmem:[#allocation10 + $0x68] sm:$0xff]
          %v730 = vld [vmem:[#allocation10 + $0x70] sm:$0xff]
          %v731 = vld [vmem:[#allocation10 + $0x78] sm:$0xff]
          %v732 = vld [vmem:[#allocation12] sm:$0xff]
          %v733 = vld [vmem:[#allocation12 + $0x8] sm:$0xff]
          %v734 = vld [vmem:[#allocation12 + $0x10] sm:$0xff]
          %v735 = vld [vmem:[#allocation12 + $0x18] sm:$0xff]
          %v736 = vld [vmem:[#allocation12 + $0x20] sm:$0xff]
          %v737 = vld [vmem:[#allocation12 + $0x28] sm:$0xff]
          %v738 = vld [vmem:[#allocation12 + $0x30] sm:$0xff]
          %v739 = vld [vmem:[#allocation12 + $0x38] sm:$0xff]
          %v740 = vld [vmem:[#allocation12 + $0x40] sm:$0xff]
          %v741 = vld [vmem:[#allocation12 + $0x48] sm:$0xff]
          %v742 = vld [vmem:[#allocation12 + $0x50] sm:$0xff]
          %v743 = vld [vmem:[#allocation12 + $0x58] sm:$0xff]
          %v744 = vld [vmem:[#allocation12 + $0x60] sm:$0xff]
          %v745 = vld [vmem:[#allocation12 + $0x68] sm:$0xff]
          %v746 = vld [vmem:[#allocation12 + $0x70] sm:$0xff]
          %v747 = vld [vmem:[#allocation12 + $0x78] sm:$0xff]
          %748 = vmatpush.msra.mxu0 %v747
          %749 = vmatpush.msra.mxu0 %v746
          %750 = vmatpush.msra.mxu0 %v745
          %751 = vmatpush.msra.mxu0 %v744
          %752 = vmatpush.msra.mxu0 %v743
          %753 = vmatpush.msra.mxu0 %v742
          %754 = vmatpush.msra.mxu0 %v741
          %755 = vmatpush.msra.mxu0 %v740
          %756 = vmatpush.msra.mxu0 %v739
          %757 = vmatpush.msra.mxu0 %v738
          %758 = vmatpush.msra.mxu0 %v737
          %759 = vmatpush.msra.mxu0 %v736
          %760 = vmatpush.msra.mxu0 %v735
          %761 = vmatpush.msra.mxu0 %v734
          %762 = vmatpush.msra.mxu0 %v733
          %763 = vmatpush.msra.mxu0 %v732
          %764 = vmatmul.f32.gmra.mxu0 %v715
          %v765 = vpop.f32.mrf.mxu0
          %v766 = vadd.f32 0.0, %v765
          %767 = vdwg.mxu0
          %768 = vmatpush.msra.mxu0 %v731
          %769 = vmatpush.msra.mxu0 %v730
          %770 = vmatpush.msra.mxu0 %v729
          %771 = vmatpush.msra.mxu0 %v728
          %772 = vmatpush.msra.mxu0 %v727
          %773 = vmatpush.msra.mxu0 %v726
          %774 = vmatpush.msra.mxu0 %v725
          %775 = vmatpush.msra.mxu0 %v724
          %776 = vmatpush.msra.mxu0 %v723
          %777 = vmatpush.msra.mxu0 %v722
          %778 = vmatpush.msra.mxu0 %v721
          %779 = vmatpush.msra.mxu0 %v720
          %780 = vmatpush.msra.mxu0 %v719
          %781 = vmatpush.msra.mxu0 %v718
          %782 = vmatpush.msra.mxu0 %v717
          %783 = vmatpush.msra.mxu0 %v716
          %784 = vmatmul.f32.gmra.mxu0 %v714
          %v785 = vpop.f32.mrf.mxu0
          %v786 = vadd.f32 %v766, %v785
          %787 = vdwg.mxu0
          %v788 = vld [vmem:[%s5] sm:$0x1]
          %v790 = vperm.slane %v788, 0
          %v792 = vadd.f32 %v786, %v790
          %v793 = vmax.f32 %v792, 0.0
          %v794 = vand.u32 2147483647, %v792
          %v795 = vsub.f32 0.0, %v794
          %v796 = vmul.f32 %v795, 1.442695
          %v797 = vpow.pop %v796
          %v798 = vadd.f32 %v797, 1.0
          %v799 = vlog2.pop %v798
          %v800 = vmul.f32 %v799, 0.6931472
          %v801 = vmul.f32 -0.5, %v797
          %v802 = vadd.f32 %v801, 1.0
          %v803 = vmul.f32 %v802, %v797
          %v804 = vand.u32 2147483647, %v797
          %vm805 = vcmp.lt.f32.partialorder %v804, 0.0004427343
          %v806 = vsel %vm805, %v803, %v800
          %v807 = vadd.f32 %v793, %v806
          %v808 = vtanh.pop %v807
          %v809 = vmul.f32 %v792, %v808
          %v810 = vld [vmem:[#allocation13] sm:$0xff]
          %v811 = vld [vmem:[#allocation13 + $0x8] sm:$0xff]
          %v812 = vld [vmem:[#allocation13 + $0x10] sm:$0xff]
          %v813 = vld [vmem:[#allocation13 + $0x18] sm:$0xff]
          %v814 = vld [vmem:[#allocation13 + $0x20] sm:$0xff]
          %v815 = vld [vmem:[#allocation13 + $0x28] sm:$0xff]
          %v816 = vld [vmem:[#allocation13 + $0x30] sm:$0xff]
          %v817 = vld [vmem:[#allocation13 + $0x38] sm:$0xff]
          %v818 = vld [vmem:[#allocation13 + $0x40] sm:$0xff]
          %v819 = vld [vmem:[#allocation13 + $0x48] sm:$0xff]
          %v820 = vld [vmem:[#allocation13 + $0x50] sm:$0xff]
          %v821 = vld [vmem:[#allocation13 + $0x58] sm:$0xff]
          %v822 = vld [vmem:[#allocation13 + $0x60] sm:$0xff]
          %v823 = vld [vmem:[#allocation13 + $0x68] sm:$0xff]
          %v824 = vld [vmem:[#allocation13 + $0x70] sm:$0xff]
          %v825 = vld [vmem:[#allocation13 + $0x78] sm:$0xff]
          %v826 = vld [vmem:[%s7] sm:$0x1]
          %v828 = vperm.slane %v826, 0
          %830 = vmatpush.msra.mxu0 %v825
          %831 = vmatpush.msra.mxu0 %v824
          %832 = vmatpush.msra.mxu0 %v823
          %833 = vmatpush.msra.mxu0 %v822
          %834 = vmatpush.msra.mxu0 %v821
          %835 = vmatpush.msra.mxu0 %v820
          %836 = vmatpush.msra.mxu0 %v819
          %837 = vmatpush.msra.mxu0 %v818
          %838 = vmatpush.msra.mxu0 %v817
          %839 = vmatpush.msra.mxu0 %v816
          %840 = vmatpush.msra.mxu0 %v815
          %841 = vmatpush.msra.mxu0 %v814
          %842 = vmatpush.msra.mxu0 %v813
          %843 = vmatpush.msra.mxu0 %v812
          %844 = vmatpush.msra.mxu0 %v811
          %845 = vmatpush.msra.mxu0 %v810
          %846 = vmatmul.f32.gmra.mxu0 %v809
          %v847 = vpop.f32.mrf.mxu0
          %v848 = vadd.f32 %v828, %v847
          %849 = vdwg.mxu0
          %v850 = vmax.f32 %v848, 0.0
          %v851 = vand.u32 2147483647, %v848
          %v852 = vsub.f32 0.0, %v851
          %v853 = vmul.f32 %v852, 1.442695
          %v854 = vpow.pop %v853
          %v855 = vadd.f32 %v854, 1.0
          %v856 = vlog2.pop %v855
          %v857 = vmul.f32 %v856, 0.6931472
          %v858 = vmul.f32 -0.5, %v854
          %v859 = vadd.f32 %v858, 1.0
          %v860 = vmul.f32 %v859, %v854
          %v861 = vand.u32 2147483647, %v854
          %vm862 = vcmp.lt.f32.partialorder %v861, 0.0004427343
          %v863 = vsel %vm862, %v860, %v857
          %v864 = vadd.f32 %v850, %v863
          %v865 = vtanh.pop %v864
          %v866 = vmul.f32 %v848, %v865
          %v867 = vld [vmem:[#allocation15] sm:$0xff]
          %v868 = vld [vmem:[#allocation15 + $0x8] sm:$0xff]
          %v869 = vld [vmem:[#allocation15 + $0x10] sm:$0xff]
          %v870 = vld [vmem:[#allocation15 + $0x18] sm:$0xff]
          %v871 = vld [vmem:[#allocation15 + $0x20] sm:$0xff]
          %v872 = vld [vmem:[#allocation15 + $0x28] sm:$0xff]
          %v873 = vld [vmem:[#allocation15 + $0x30] sm:$0xff]
          %v874 = vld [vmem:[#allocation15 + $0x38] sm:$0xff]
          %v875 = vld [vmem:[#allocation15 + $0x40] sm:$0xff]
          %v876 = vld [vmem:[#allocation15 + $0x48] sm:$0xff]
          %v877 = vld [vmem:[#allocation15 + $0x50] sm:$0xff]
          %v878 = vld [vmem:[#allocation15 + $0x58] sm:$0xff]
          %v879 = vld [vmem:[#allocation15 + $0x60] sm:$0xff]
          %v880 = vld [vmem:[#allocation15 + $0x68] sm:$0xff]
          %v881 = vld [vmem:[#allocation15 + $0x70] sm:$0xff]
          %v882 = vld [vmem:[#allocation15 + $0x78] sm:$0xff]
          %v883 = vld [vmem:[%s9] sm:$0x1]
          %v885 = vperm.slane %v883, 0
          %887 = vmatpush.msra.mxu0 %v882
          %888 = vmatpush.msra.mxu0 %v881
          %889 = vmatpush.msra.mxu0 %v880
          %890 = vmatpush.msra.mxu0 %v879
          %891 = vmatpush.msra.mxu0 %v878
          %892 = vmatpush.msra.mxu0 %v877
          %893 = vmatpush.msra.mxu0 %v876
          %894 = vmatpush.msra.mxu0 %v875
          %895 = vmatpush.msra.mxu0 %v874
          %896 = vmatpush.msra.mxu0 %v873
          %897 = vmatpush.msra.mxu0 %v872
          %898 = vmatpush.msra.mxu0 %v871
          %899 = vmatpush.msra.mxu0 %v870
          %900 = vmatpush.msra.mxu0 %v869
          %901 = vmatpush.msra.mxu0 %v868
          %902 = vmatpush.msra.mxu0 %v867
          %903 = vmatmul.f32.gmra.mxu0 %v866
          %v904 = vpop.f32.mrf.mxu0
          %v905 = vadd.f32 %v885, %v904
          %906 = vdwg.mxu0
          %907 = vst [vmem:[#allocation17] sm:$0xff] %v848
          %908 = vst [vmem:[#allocation16] sm:$0xff] %v905
        $region88: #{tpu_custom_call.1} parent=59 // pred_fallthru
          _
        // Predicated region
        $region89: #{tpu_custom_call.1} parent=59 // pred_check
          %p909 = pneg %p264
        $region90: #{tpu_custom_call.1} parent=59 // pred_check_branch
          %911 = sbr.rel (%p909) target = $region92
        $region91: #{tpu_custom_call.1} parent=59 // pred_region
          %913 = vsyncadd [#allocation9], 0
          %s915 = sshll.u32 [#allocation16], 4
          %s916 = int_to_ptr.vmem [resolvable:$true] %s915
          %s917 = sshll.u32 %s10, 4
          %s918 = int_to_ptr.hbm [resolvable:$true] %s917
          %920 = dma.vmem_to_hbm [thread:$0]  %s916, 128, %s918, [#allocation9]
        $region92: #{tpu_custom_call.1} parent=59 // pred_fallthru
          _
        // Predicated region
        $region93: #{tpu_custom_call.1} parent=59 // pred_check
          %p921 = pneg %p285
        $region94: #{tpu_custom_call.1} parent=59 // pred_check_branch
          %923 = sbr.rel (%p921) target = $region96
        $region95: #{tpu_custom_call.1} parent=59 // pred_region
          %925 = vsyncadd [#allocation18], 0
          %s927 = sshll.u32 [#allocation17], 4
          %s928 = int_to_ptr.vmem [resolvable:$true] %s927
          %s929 = sshll.u32 %s11, 4
          %s930 = int_to_ptr.hbm [resolvable:$true] %s929
          %932 = dma.vmem_to_hbm [thread:$0]  %s928, 128, %s930, [#allocation18]
        $region96: #{tpu_custom_call.1} parent=59 // pred_fallthru
          _
        // Predicated region
        $region97: #{tpu_custom_call.1} parent=59 // pred_check
          %p933 = pneg %p264
        $region98: #{tpu_custom_call.1} parent=59 // pred_check_branch
          %935 = sbr.rel (%p933) target = $region100
        $region99: #{tpu_custom_call.1} parent=59 // pred_region
          %937 = dma.done [#allocation9], 128
        $region100: #{tpu_custom_call.1} parent=59 // pred_fallthru
          _
        // Predicated region
        $region101: #{tpu_custom_call.1} parent=59 // pred_check
          %p938 = pneg %p285
        $region102: #{tpu_custom_call.1} parent=59 // pred_check_branch
          %940 = sbr.rel (%p938) target = $region104
        $region103: #{tpu_custom_call.1} parent=59 // pred_region
          %942 = dma.done [#allocation18], 128
        $region104: #{tpu_custom_call.1} parent=59 // pred_fallthru
          _
      $region60: #{tpu_custom_call.1} parent=5 // pred_fallthru
        _
      %p943 = scmp.le.s32.totalorder 2, %s26
      // Predicated region
      $region105: #{tpu_custom_call.1} parent=5 // pred_check
        %p944 = pneg %p943
      $region106: #{tpu_custom_call.1} parent=5 // pred_check_branch
        %946 = sbr.rel (%p944) target = $region108
      $region107: #{tpu_custom_call.1} parent=5 // pred_region
        %s947 = ssub.s32 %s26, 2
      $region108: #{tpu_custom_call.1} parent=5 // pred_fallthru
        _
    $region6: #{tpu_custom_call.1} parent=1 // loop_footer
      %s30 = sadd.s32 1, %s26
    $region7: #{tpu_custom_call.1} parent=1 // loop_footer_branch
      %25 = sbr.rel target = $region3
    $region8: #{tpu_custom_call.1} parent=1 // loop_exit
      _
    %948 = vsyncpa [#allocation8], 1
    %s949 = scalar_lea.sflag [#allocation8], 1
    %950 = vsyncpa %s949, 1
    %951 = vsyncpa [#allocation11], 1
    %952 = vsyncpa [#allocation14], 1
    %953 = vsyncpa [#allocation9], 1
    %s954 = scalar_lea.sflag [#allocation9], 1
    %955 = vsyncpa %s954, 1
    %956 = vsyncpa [#allocation18], 1

</llo_original>
